<compile_context>
chip_gen: v7x
topology: tpu7x:2x2x1
jax: 0.10.0
libtpu: 0.0.40
codegen_flags: <defaults>
</compile_context>

<pallas_src>
import jax
import jax.numpy as jnp
from jax.experimental import pallas as pl
from jax.experimental.pallas import tpu as pltpu

BN_EPS = 1e-5
RESERVE_BYTES = 2 << 20          # headroom for compiler-internal scratch
TARGET_TILE_BYTES = 4 << 20      # ~4 MiB streamed x tile per grid step


def _round_up(x, m):
    return ((x + m - 1) // m) * m


def _cdiv(a, b):
    return (a + b - 1) // b


def _vmem_limit_bytes():
    """Generation-aware VMEM budget: 3/4 of physical (48 MiB v7x, 96 MiB v5e/v6e)."""
    try:
        phys = int(pltpu.get_tpu_info().vmem_capacity_bytes)
    except Exception:
        phys = 64 << 20
    return (phys * 3) // 4


# ---------------------------------------------------------------------------
# Kernel
# ---------------------------------------------------------------------------
def dis_decoder_kernel(x_ref, w1_ref, c1_ref, w2_ref, c2_ref, w3_ref, c3_ref,
                       o_ref, acc_ref):
    k = pl.program_id(1)

    @pl.when(k == 0)
    def _():
        acc_ref[...] = jnp.zeros_like(acc_ref)

    # fc_1 partial: (TB, TK) @ (TK, 128), bf16 x bf16 -> f32 accumulate on the MXU.
    acc_ref[...] += jnp.dot(x_ref[...].astype(jnp.bfloat16), w1_ref[...],
                            preferred_element_type=jnp.float32)

    @pl.when(k == pl.num_programs(1) - 1)
    def _():
        # fc_1 bias (BN folded) + ReLU.  Dropout(0.5) -> identity (eval).
        h = jnp.maximum(acc_ref[...] + c1_ref[...], 0.0)

        # fc_2: Linear + ReLU.  Dropout(0.5) -> identity (eval).
        h = jnp.dot(h.astype(jnp.bfloat16), w2_ref[...],
                    preferred_element_type=jnp.float32)
        h = jnp.maximum(h + c2_ref[...], 0.0)

        # fc_3 (64 -> 1): VPU multiply + lane reduction; avoids a (TB, 1) MXU matmul.
        h = jnp.sum(h * w3_ref[...], axis=-1, keepdims=True) + c3_ref[...]
        o_ref[...] = jnp.maximum(h, 0.0).astype(o_ref.dtype)

    # TODO(synk): training-mode dropout / batch-statistics BN not implemented
    # (inference-only kernel).


# ---------------------------------------------------------------------------
# Parameter construction (PyTorch-default init + BN folding)
# ---------------------------------------------------------------------------
def _linear_init(key, fan_in, fan_out):
    """nn.Linear default init: U(-1/sqrt(fan_in), 1/sqrt(fan_in)); stored (in, out)."""
    kw, kb = jax.random.split(key)
    bound = 1.0 / jnp.sqrt(jnp.float32(fan_in))
    w = jax.random.uniform(kw, (fan_in, fan_out), jnp.float32, -bound, bound)
    b = jax.random.uniform(kb, (1, fan_out), jnp.float32, -bound, bound)
    return w, b


def _bn_fold(fan_out):
    """BatchNorm1d defaults (gamma=1, beta=0, mean=0, var=1) -> eval scale/shift."""
    gamma = jnp.ones((1, fan_out), jnp.float32)
    beta = jnp.zeros((1, fan_out), jnp.float32)
    running_mean = jnp.zeros((1, fan_out), jnp.float32)
    running_var = jnp.ones((1, fan_out), jnp.float32)
    scale = gamma * jax.lax.rsqrt(running_var + BN_EPS)
    shift = beta - running_mean * scale
    return scale, shift


def make_dis_decoder_params(feat_dim, key=jax.random.PRNGKey(0)):
    """Returns (w1, c1, w2, c2, w3_row, c3) with BN folded into the linears.

    w1: (feat_dim, 128) bf16 ; c1: (1, 128) f32
    w2: (128, 64)       bf16 ; c2: (1, 64)  f32
    w3_row: (1, 64)     f32  ; c3: (1, 1)   f32
    """
    k1, k2, k3 = jax.random.split(key, 3)

    w1, b1 = _linear_init(k1, feat_dim, 128)
    s1, t1 = _bn_fold(128)
    w1f = (w1 * s1).astype(jnp.bfloat16)
    c1 = b1 * s1 + t1

    w2, b2 = _linear_init(k2, 128, 64)
    s2, t2 = _bn_fold(64)
    w2f = (w2 * s2).astype(jnp.bfloat16)
    c2 = b2 * s2 + t2

    w3, b3 = _linear_init(k3, 64, 1)
    s3, t3 = _bn_fold(1)
    w3_row = (w3 * s3).reshape(1, 64).astype(jnp.float32)   # used on the VPU
    c3 = b3 * s3 + t3

    return (w1f, c1, w2f, c2, w3_row, c3)


# ---------------------------------------------------------------------------
# Wrapper
# ---------------------------------------------------------------------------
def dis_decoder_forward(x, params):
    """x: (B, N, C) with N*C == feat_dim. Returns (B, 1) float32.

    For best HBM bandwidth the caller should supply x already in bf16 (the cast
    below is a fallback and may add an extra HBM round trip if not fused upstream).
    """
    w1, c1, w2, c2, w3_row, c3 = params
    B = x.shape[0]
    x2d = x.reshape(B, -1)
    feat_dim = x2d.shape[1]
    assert w1.shape[0] == feat_dim

    if x2d.dtype != jnp.bfloat16:
        x2d = x2d.astype(jnp.bfloat16)
    x_item = 2  # bf16

    # ---- VMEM budget (generation-aware) -----------------------------------
    vmem_limit = _vmem_limit_bytes()
    small_w_bytes = sum(int(a.size) * a.dtype.itemsize
                        for a in (c1, w2, c2, w3_row, c3))
    avail = vmem_limit - RESERVE_BYTES - small_w_bytes

    # Per-row fixed VMEM: f32 accumulator row + double-buffered output row.
    per_row_fixed = 128 * 4 + 2 * 4

    # ---- Decide K tiling ---------------------------------------------------
    full_w1_bytes = feat_dim * 128 * 2               # bf16, single-buffered
    min_tb = 256
    if full_w1_bytes + min_tb * (2 * feat_dim * x_item + per_row_fixed) <= avail:
        TK = feat_dim
        num_k = 1
        w1_bufs = 1
        feat_pad = feat_dim
    else:
        TK = 512                                      # lane-aligned K tile
        feat_pad = _round_up(feat_dim, TK)
        num_k = feat_pad // TK
        w1_bufs = 2                                   # streamed, double-buffered
        if feat_pad != feat_dim:
            x2d = jnp.pad(x2d, ((0, 0), (0, feat_pad - feat_dim)))
            w1 = jnp.pad(w1, ((0, feat_pad - feat_dim), (0, 0)))

    # ---- Batch tile TB sized by bytes --------------------------------------
    w1_block_bytes = w1_bufs * TK * 128 * 2
    per_row = 2 * TK * x_item + per_row_fixed         # double-buffered x tile + fixed
    tb_cap = (avail - w1_block_bytes) // per_row
    tb_cap = max(8, (tb_cap // 8) * 8)

    tb_target = max(8, (TARGET_TILE_BYTES // (TK * x_item)) // 8 * 8)
    tb_max = min(tb_cap, tb_target)

    num_b = _cdiv(B, tb_max)
    if num_b == 1 and B >= 16:
        num_b = 2                 # v7x: give both TensorCores a batch tile
    TB = min(_round_up(_cdiv(B, num_b), 8), tb_cap)   # balanced tiles, low padding

    B_pad = _round_up(B, TB)
    if B_pad != B:
        x2d = jnp.pad(x2d, ((0, B_pad - B), (0, 0)))  # garbage rows sliced off below
    grid = (B_pad // TB, num_k)

    cost = pl.CostEstimate(
        flops=int(2 * B_pad * (feat_pad * 128 + 128 * 64 + 64)),
        transcendentals=0,
        bytes_accessed=int(x2d.size) * x_item
        + int(w1.size) * 2 + small_w_bytes + B_pad * 4,
    )

    resident = pl.Buffered(1)     # constant-index inputs: no double buffering
    w1_mode = pl.Buffered(1) if num_k == 1 else pl.Buffered(2)

    out = pl.pallas_call(
        dis_decoder_kernel,
        out_shape=jax.ShapeDtypeStruct((B_pad, 1), jnp.float32),
        grid=grid,
        in_specs=[
            pl.BlockSpec((TB, TK), lambda i, k: (i, k)),                 # x (streamed)
            pl.BlockSpec((TK, 128), lambda i, k: (k, 0),
                         pipeline_mode=w1_mode),                         # w1
            pl.BlockSpec(c1.shape, lambda i, k: (0, 0), pipeline_mode=resident),
            pl.BlockSpec(w2.shape, lambda i, k: (0, 0), pipeline_mode=resident),
            pl.BlockSpec(c2.shape, lambda i, k: (0, 0), pipeline_mode=resident),
            pl.BlockSpec(w3_row.shape, lambda i, k: (0, 0), pipeline_mode=resident),
            pl.BlockSpec(c3.shape, lambda i, k: (0, 0), pipeline_mode=resident),
        ],
        out_specs=pl.BlockSpec((TB, 1), lambda i, k: (i, 0)),
        scratch_shapes=[pltpu.VMEM((TB, 128), jnp.float32)],
        compiler_params=pltpu.CompilerParams(
            dimension_semantics=("parallel", "arbitrary"),
            vmem_limit_bytes=int(vmem_limit),
        ),
        cost_estimate=cost,
    )(x2d, w1, c1, w2, c2, w3_row, c3)

    return out[:B]


# ---------------------------------------------------------------------------
# Pure-JAX reference (same eval-mode, bf16-weight semantics)
# ---------------------------------------------------------------------------
def dis_decoder_ref(x, params):
    w1, c1, w2, c2, w3_row, c3 = params
    B = x.shape[0]
    h = x.reshape(B, -1)
    h = h.astype(jnp.bfloat16).astype(jnp.float32)
    h = jnp.maximum(jnp.dot(h, w1.astype(jnp.float32)) + c1, 0.0)
    h = h.astype(jnp.bfloat16).astype(jnp.float32)
    h = jnp.maximum(jnp.dot(h, w2.astype(jnp.float32)) + c2, 0.0)
    h = jnp.maximum(jnp.sum(h * w3_row, axis=-1, keepdims=True) + c3, 0.0)
    return h


if __name__ == "__main__":
    # Small deterministic example: B=2, N=8, C=4  =>  feat_dim = N*C = 32.
    B, N, C = 2, 8, 4
    feat_dim = N * C

    key = jax.random.PRNGKey(0)
    kx, kp = jax.random.split(key)
    # Supply x already in bf16 so the HBM stream into the kernel is 2 bytes/elem.
    x = jax.random.normal(kx, (B, N, C), jnp.float32).astype(jnp.bfloat16)
    params = make_dis_decoder_params(feat_dim, kp)

    out = dis_decoder_forward(x, params)
    out = jax.block_until_ready(out)

    ref = dis_decoder_ref(x, params)
    assert out.shape == (B, 1), out.shape
    assert jnp.allclose(out, ref, atol=2e-3, rtol=2e-3), (out, ref)

    print("KERNEL_OK")
</pallas_src>

<mosaic_0001>
module attributes {stable_mosaic.version = 11 : i64} {
  func.func @dis_decoder_kernel(%arg0: i32, %arg1: i32, %arg2: memref<8x32xbf16, #tpu.memory_space<vmem>>, %arg3: memref<32x128xbf16, #tpu.memory_space<vmem>>, %arg4: memref<1x128xf32, #tpu.memory_space<vmem>>, %arg5: memref<128x64xbf16, #tpu.memory_space<vmem>>, %arg6: memref<1x64xf32, #tpu.memory_space<vmem>>, %arg7: memref<1x64xf32, #tpu.memory_space<vmem>>, %arg8: memref<1x1xf32, #tpu.memory_space<vmem>>, %arg9: memref<8x1xf32, #tpu.memory_space<vmem>>, %arg10: memref<8x128xf32, #tpu.memory_space<vmem>>) attributes {dimension_semantics = [#tpu.dimension_semantics<parallel>, #tpu.dimension_semantics<arbitrary>], iteration_bounds = array<i64: 1, 1>, scalar_prefetch = 0 : i64, scratch_operands = 1 : i64, tpu.core_type = #tpu.core_type<tc>, window_params = [{transform_indices = @transform_0, window_bounds = array<i64: 8, 32>}, {pipeline_mode = #tpu.pipeline_mode<synchronous>, transform_indices = @transform_1, window_bounds = array<i64: 32, 128>}, {pipeline_mode = #tpu.pipeline_mode<synchronous>, transform_indices = @transform_2, window_bounds = array<i64: 1, 128>}, {pipeline_mode = #tpu.pipeline_mode<synchronous>, transform_indices = @transform_3, window_bounds = array<i64: 128, 64>}, {pipeline_mode = #tpu.pipeline_mode<synchronous>, transform_indices = @transform_4, window_bounds = array<i64: 1, 64>}, {pipeline_mode = #tpu.pipeline_mode<synchronous>, transform_indices = @transform_5, window_bounds = array<i64: 1, 64>}, {pipeline_mode = #tpu.pipeline_mode<synchronous>, transform_indices = @transform_6, window_bounds = array<i64: 1, 1>}, {transform_indices = @transform_7, window_bounds = array<i64: 8, 1>}]} {
    %c0_i32 = arith.constant 0 : i32
    %0 = arith.cmpi eq, %arg1, %c0_i32 : i32
    %1 = arith.extui %0 : i1 to i32
    %c0_i32_0 = arith.constant 0 : i32
    %2 = arith.cmpi ne, %1, %c0_i32_0 : i32
    scf.if %2 {
      %cst_10 = arith.constant 0.000000e+00 : f32
      %12 = vector.broadcast %cst_10 : f32 to vector<8x128xf32>
      %c0_11 = arith.constant 0 : index
      %c0_12 = arith.constant 0 : index
      %13 = vector.load %arg10[%c0_11, %c0_12] : memref<8x128xf32, #tpu.memory_space<vmem>>, vector<8x128xf32>
      tpu.vector_store %arg10[%c0_11, %c0_12], %12 {strides = array<i32>} : memref<8x128xf32, #tpu.memory_space<vmem>>, vector<8x128xf32>,
    } else {
    }
    %c0 = arith.constant 0 : index
    %c0_1 = arith.constant 0 : index
    %3 = vector.load %arg10[%c0, %c0_1] : memref<8x128xf32, #tpu.memory_space<vmem>>, vector<8x128xf32>
    %c0_2 = arith.constant 0 : index
    %c0_3 = arith.constant 0 : index
    %4 = vector.load %arg2[%c0_2, %c0_3] : memref<8x32xbf16, #tpu.memory_space<vmem>>, vector<8x32xbf16>
    %c0_4 = arith.constant 0 : index
    %c0_5 = arith.constant 0 : index
    %5 = vector.load %arg3[%c0_4, %c0_5] : memref<32x128xbf16, #tpu.memory_space<vmem>>, vector<32x128xbf16>
    %cst = arith.constant dense<0.000000e+00> : vector<8x128xf32>
    %6 = tpu.matmul %4, %5, %cst {dimension_numbers = #tpu.dot_dimension_numbers<[1], [0], [0], [1], [0, 0, 1, 1], [], []>} : vector<8x32xbf16>, vector<32x128xbf16>, vector<8x128xf32> -> vector<8x128xf32>
    %7 = arith.addf %3, %6 : vector<8x128xf32>
    %c0_6 = arith.constant 0 : index
    %c0_7 = arith.constant 0 : index
    %8 = vector.load %arg10[%c0_6, %c0_7] : memref<8x128xf32, #tpu.memory_space<vmem>>, vector<8x128xf32>
    tpu.vector_store %arg10[%c0_6, %c0_7], %7 {strides = array<i32>} : memref<8x128xf32, #tpu.memory_space<vmem>>, vector<8x128xf32>,
    %c0_i32_8 = arith.constant 0 : i32
    %9 = arith.cmpi eq, %arg1, %c0_i32_8 : i32
    %10 = arith.extui %9 : i1 to i32
    %c0_i32_9 = arith.constant 0 : i32
    %11 = arith.cmpi ne, %10, %c0_i32_9 : i32
    scf.if %11 {
      %c0_10 = arith.constant 0 : index
      %c0_11 = arith.constant 0 : index
      %12 = vector.load %arg10[%c0_10, %c0_11] : memref<8x128xf32, #tpu.memory_space<vmem>>, vector<8x128xf32>
      %c0_12 = arith.constant 0 : index
      %c0_13 = arith.constant 0 : index
      %13 = vector.load %arg4[%c0_12, %c0_13] : memref<1x128xf32, #tpu.memory_space<vmem>>, vector<1x128xf32>
      %14 = vector.broadcast %13 : vector<1x128xf32> to vector<8x128xf32>
      %15 = arith.addf %12, %14 : vector<8x128xf32>
      %cst_14 = arith.constant 0.000000e+00 : f32
      %16 = vector.broadcast %cst_14 : f32 to vector<8x128xf32>
      %17 = arith.maximumf %15, %16 : vector<8x128xf32>
      %18 = arith.truncf %17 : vector<8x128xf32> to vector<8x128xbf16>
      %c0_15 = arith.constant 0 : index
      %c0_16 = arith.constant 0 : index
      %19 = vector.load %arg5[%c0_15, %c0_16] : memref<128x64xbf16, #tpu.memory_space<vmem>>, vector<128x64xbf16>
      %cst_17 = arith.constant dense<0.000000e+00> : vector<8x64xf32>
      %20 = tpu.matmul %18, %19, %cst_17 {dimension_numbers = #tpu.dot_dimension_numbers<[1], [0], [0], [1], [0, 0, 1, 1], [], []>} : vector<8x128xbf16>, vector<128x64xbf16>, vector<8x64xf32> -> vector<8x64xf32>
      %c0_18 = arith.constant 0 : index
      %c0_19 = arith.constant 0 : index
      %21 = vector.load %arg6[%c0_18, %c0_19] : memref<1x64xf32, #tpu.memory_space<vmem>>, vector<1x64xf32>
      %22 = vector.broadcast %21 : vector<1x64xf32> to vector<8x64xf32>
      %23 = arith.addf %20, %22 : vector<8x64xf32>
      %cst_20 = arith.constant 0.000000e+00 : f32
      %24 = vector.broadcast %cst_20 : f32 to vector<8x64xf32>
      %25 = arith.maximumf %23, %24 : vector<8x64xf32>
      %c0_21 = arith.constant 0 : index
      %c0_22 = arith.constant 0 : index
      %26 = vector.load %arg7[%c0_21, %c0_22] : memref<1x64xf32, #tpu.memory_space<vmem>>, vector<1x64xf32>
      %27 = vector.broadcast %26 : vector<1x64xf32> to vector<8x64xf32>
      %28 = arith.mulf %25, %27 : vector<8x64xf32>
      %cst_23 = arith.constant dense<0.000000e+00> : vector<8xf32>
      %29 = vector.multi_reduction <add>, %28, %cst_23 [1] : vector<8x64xf32> to vector<8xf32>
      %30 = vector.shape_cast %29 : vector<8xf32> to vector<8x1xf32>
      %c0_24 = arith.constant 0 : index
      %c0_25 = arith.constant 0 : index
      %31 = vector.load %arg8[%c0_24, %c0_25] : memref<1x1xf32, #tpu.memory_space<vmem>>, vector<1x1xf32>
      %32 = vector.broadcast %31 : vector<1x1xf32> to vector<8x1xf32>
      %33 = arith.addf %30, %32 : vector<8x1xf32>
      %cst_26 = arith.constant 0.000000e+00 : f32
      %34 = vector.broadcast %cst_26 : f32 to vector<8x1xf32>
      %35 = arith.maximumf %33, %34 : vector<8x1xf32>
      %c0_27 = arith.constant 0 : index
      %c0_28 = arith.constant 0 : index
      %36 = vector.load %arg9[%c0_27, %c0_28] : memref<8x1xf32, #tpu.memory_space<vmem>>, vector<8x1xf32>
      tpu.vector_store %arg9[%c0_27, %c0_28], %35 {strides = array<i32>} : memref<8x1xf32, #tpu.memory_space<vmem>>, vector<8x1xf32>,
    } else {
    }
    return
  }
  func.func @transform_0(%arg0: i32, %arg1: i32) -> (i32, i32) {
    %c0_i32 = arith.constant 0 : i32
    return %arg0, %arg1 : i32, i32
  }
  func.func @transform_1(%arg0: i32, %arg1: i32) -> (i32, i32) {
    %c0_i32 = arith.constant 0 : i32
    %c0_i32_0 = arith.constant 0 : i32
    return %arg1, %c0_i32 : i32, i32
  }
  func.func @transform_2(%arg0: i32, %arg1: i32) -> (i32, i32) {
    %c0_i32 = arith.constant 0 : i32
    %c0_i32_0 = arith.constant 0 : i32
    %c0_i32_1 = arith.constant 0 : i32
    return %c0_i32, %c0_i32_0 : i32, i32
  }
  func.func @transform_3(%arg0: i32, %arg1: i32) -> (i32, i32) {
    %c0_i32 = arith.constant 0 : i32
    %c0_i32_0 = arith.constant 0 : i32
    %c0_i32_1 = arith.constant 0 : i32
    return %c0_i32, %c0_i32_0 : i32, i32
  }
  func.func @transform_4(%arg0: i32, %arg1: i32) -> (i32, i32) {
    %c0_i32 = arith.constant 0 : i32
    %c0_i32_0 = arith.constant 0 : i32
    %c0_i32_1 = arith.constant 0 : i32
    return %c0_i32, %c0_i32_0 : i32, i32
  }
  func.func @transform_5(%arg0: i32, %arg1: i32) -> (i32, i32) {
    %c0_i32 = arith.constant 0 : i32
    %c0_i32_0 = arith.constant 0 : i32
    %c0_i32_1 = arith.constant 0 : i32
    return %c0_i32, %c0_i32_0 : i32, i32
  }
  func.func @transform_6(%arg0: i32, %arg1: i32) -> (i32, i32) {
    %c0_i32 = arith.constant 0 : i32
    %c0_i32_0 = arith.constant 0 : i32
    %c0_i32_1 = arith.constant 0 : i32
    return %c0_i32, %c0_i32_0 : i32, i32
  }
  func.func @transform_7(%arg0: i32, %arg1: i32) -> (i32, i32) {
    %c0_i32 = arith.constant 0 : i32
    %c0_i32_0 = arith.constant 0 : i32
    return %arg0, %c0_i32 : i32, i32
  }
}

</mosaic_0001>

<llo_original>
// kernel: tpu_custom_call.1
$region0: #{tpu_custom_call.1}
  #allocation0 [shape = 'u32[]', space=smem, size = 0x4, offset = 0x4, fixed_abs, tag = 'smem constant byte address 0x4 - core index']
  #allocation1 [shape = 'u32[144,128]{1,0:T(1,128)}', space=vmem, size = 0x12000, scoped, tag = 'internal scratch']
  #allocation2 [shape = 'f32[8,128]{1,0:T(8,128)}', space=vmem, size = 0x1000, scoped, tag = 'scratch operand']
  #allocation3 [shape = 'f32[1,1]{1,0:T(1,128)S(1)}', space=vmem, size = 0x200, scoped, tag = 'scoped memory for tpu_custom_call.1']
  %s0 = inlined_call_operand.vmem [shape: bf16[8,32], index: 0, kind: input, shape index: {}]
  %s1 = inlined_call_operand.vmem [shape: bf16[32,128], index: 1, kind: input, shape index: {}]
  %s2 = inlined_call_operand.vmem [shape: f32[1,128], index: 2, kind: input, shape index: {}]
  %s3 = inlined_call_operand.vmem [shape: bf16[128,64], index: 3, kind: input, shape index: {}]
  %s4 = inlined_call_operand.vmem [shape: f32[1,64], index: 4, kind: input, shape index: {}]
  %s5 = inlined_call_operand.vmem [shape: f32[1,64], index: 5, kind: input, shape index: {}]
  %s6 = inlined_call_operand.<no memory space> [shape: f32[1,1], index: 6, kind: input, shape index: {}]
  %s7 = inlined_call_operand.vmem [shape: f32[8,1], index: 7, kind: output, shape index: {}]
  %s8 = sld [smem:[#allocation0]]
  $region46: #{tpu_custom_call.1} parent=0
    _
  %s10 = ssub.s32 1, %s8
  %s11 = scalar_select 0, %s10, %s8
  %v12 = vstv %s6
  %13 = vst [vmem:[#allocation3] sm:$0x1] %v12
  // Predicated region
  $region2: #{tpu_custom_call.1} parent=0 // pred_check
    _
  $region3: #{tpu_custom_call.1} parent=0 // pred_check_branch
    %15 = sbr.rel (0) target = $region5
  $region4: #{tpu_custom_call.1} parent=0 // pred_region
    _
  $region5: #{tpu_custom_call.1} parent=0 // pred_fallthru
    _
  // Predicated region
  $region6: #{tpu_custom_call.1} parent=0 // pred_check
    _
  $region7: #{tpu_custom_call.1} parent=0 // pred_check_branch
    %17 = sbr.rel (0) target = $region9
  $region8: #{tpu_custom_call.1} parent=0 // pred_region
    _
  $region9: #{tpu_custom_call.1} parent=0 // pred_fallthru
    _
  // Predicated region
  $region10: #{tpu_custom_call.1} parent=0 // pred_check
    _
  $region11: #{tpu_custom_call.1} parent=0 // pred_check_branch
    %19 = sbr.rel (0) target = $region13
  $region12: #{tpu_custom_call.1} parent=0 // pred_region
    _
  $region13: #{tpu_custom_call.1} parent=0 // pred_fallthru
    _
  // Predicated region
  $region14: #{tpu_custom_call.1} parent=0 // pred_check
    _
  $region15: #{tpu_custom_call.1} parent=0 // pred_check_branch
    %21 = sbr.rel (0) target = $region17
  $region16: #{tpu_custom_call.1} parent=0 // pred_region
    _
  $region17: #{tpu_custom_call.1} parent=0 // pred_fallthru
    _
  // Predicated region
  $region18: #{tpu_custom_call.1} parent=0 // pred_check
    _
  $region19: #{tpu_custom_call.1} parent=0 // pred_check_branch
    %23 = sbr.rel (0) target = $region21
  $region20: #{tpu_custom_call.1} parent=0 // pred_region
    _
  $region21: #{tpu_custom_call.1} parent=0 // pred_fallthru
    _
  // Predicated region
  $region22: #{tpu_custom_call.1} parent=0 // pred_check
    _
  $region23: #{tpu_custom_call.1} parent=0 // pred_check_branch
    %25 = sbr.rel (0) target = $region25
  $region24: #{tpu_custom_call.1} parent=0 // pred_region
    _
  $region25: #{tpu_custom_call.1} parent=0 // pred_fallthru
    _
  // Predicated region
  $region26: #{tpu_custom_call.1} parent=0 // pred_check
    _
  $region27: #{tpu_custom_call.1} parent=0 // pred_check_branch
    %27 = sbr.rel (0) target = $region29
  $region28: #{tpu_custom_call.1} parent=0 // pred_region
    _
  $region29: #{tpu_custom_call.1} parent=0 // pred_fallthru
    _
  %p29 = scmp.eq.s32.totalorder 0, 0
  // Predicated region
  $region30: #{tpu_custom_call.1} parent=0 // pred_check
    %p30 = pneg %p29
  $region31: #{tpu_custom_call.1} parent=0 // pred_check_branch
    %32 = sbr.rel (%p30) target = $region33
  $region32: #{tpu_custom_call.1} parent=0 // pred_region
    %33 = vst [vmem:[#allocation2] sm:$0xff] 0.0
  $region33: #{tpu_custom_call.1} parent=0 // pred_fallthru
    _
  %v34 = vld [vmem:[#allocation2] sm:$0xff]
  %v35 = vld [vmem:[%s0] sm:$0xf]
  %v36 = vld [vmem:[%s1] sm:$0xf]
  %v37 = vld [vmem:[%s1 + $0x4] sm:$0xf]
  %v38 = vld [vmem:[%s1 + $0x8] sm:$0xf]
  %v39 = vld [vmem:[%s1 + $0xc] sm:$0xf]
  %v44 = vunpack.c.l.b16 %v36
  %v45 = vunpack.c.l.b16 %v37
  %v46 = vunpack.c.l.b16 %v38
  %v47 = vunpack.c.l.b16 %v39
  %v48 = vpack.c.b16 %v45, %v44
  %v49 = vpack.c.b16 %v47, %v46
  %vm52 = vcmask 261120
  %v54 = vsel %vm52, %v35, 0
  %56 = vmatprep.subr.bf16.mxu0 0
  %57 = vmatpush1.bf16.msra.mxu0 %v48
  %58 = vmatprep.subr.bf16.mxu0 0
  %59 = vmatpush1.bf16.msra.mxu0 %v49
  %60 = vmatprep.subr.bf16.mxu0 0
  %61 = vmatpush1.bf16.msra.mxu0 0
  %62 = vmatprep.subr.bf16.mxu0 0
  %63 = vmatpush1.bf16.msra.mxu0 0
  %64 = vmatprep.subr.bf16.mxu0 0
  %65 = vmatpush1.bf16.msra.mxu0 0
  %66 = vmatprep.subr.bf16.mxu0 0
  %67 = vmatpush1.bf16.msra.mxu0 0
  %68 = vmatprep.subr.bf16.mxu0 0
  %69 = vmatpush1.bf16.msra.mxu0 0
  %70 = vmatprep.subr.bf16.mxu0 0
  %71 = vmatpush1.bf16.msra.mxu0 0
  %72 = vmatprep.subr.bf16.mxu0 0
  %73 = vmatpush1.bf16.msra.mxu0 0
  %74 = vmatprep.subr.bf16.mxu0 0
  %75 = vmatpush1.bf16.msra.mxu0 0
  %76 = vmatprep.subr.bf16.mxu0 0
  %77 = vmatpush1.bf16.msra.mxu0 0
  %78 = vmatprep.subr.bf16.mxu0 0
  %79 = vmatpush1.bf16.msra.mxu0 0
  %80 = vmatprep.subr.bf16.mxu0 0
  %81 = vmatpush1.bf16.msra.mxu0 0
  %82 = vmatprep.subr.bf16.mxu0 0
  %83 = vmatpush1.bf16.msra.mxu0 0
  %84 = vmatprep.subr.bf16.mxu0 0
  %85 = vmatpush1.bf16.msra.mxu0 0
  %86 = vmatprep.subr.bf16.mxu0 0
  %87 = vmatpush1.bf16.msra.mxu0 0
  %88 = vmatprep.mubr.bf16.mxu0 0
  %89 = vmatmul.mubr.bf16.gmra.mrb[0].mxu0 %v54
  %v90 = vpop.f32.mrb[0].mxu0
  %v91 = vadd.f32 0.0, %v90
  %v92 = vpop.f32.mrb[0].mxu0
  %v93 = vpop.f32.mrb[0].mxu0
  %v94 = vpop.f32.mrb[0].mxu0
  %95 = vdwg.mxu0
  %v96 = vadd.f32 %v34, %v91
  %97 = vst [vmem:[#allocation2] sm:$0xff] %v96
  // Predicated region
  $region34: #{tpu_custom_call.1} parent=0 // pred_check
    %p98 = pneg %p29
  $region35: #{tpu_custom_call.1} parent=0 // pred_check_branch
    %100 = sbr.rel (%p98) target = $region37
  $region36: #{tpu_custom_call.1} parent=0 // pred_region
    %v101 = vld [vmem:[#allocation2] sm:$0xff]
    %v102 = vld [vmem:[%s2] sm:$0x1]
    %v104 = vlaneseq
    %v105 = vshrl.u32 %v104, 7
    %v106 = vsub.s32 0, %v105
    %v107 = vrot.slane %v102, %v106
    %v109 = vadd.f32 %v101, %v107
    %v110 = vmax.f32 %v109, 0.0
    %v111 = vpack.c.bf16 %v110, %v110
    %v112 = vld [vmem:[%s3] sm:$0xf]
    %v113 = vld [vmem:[%s3 + $0x4] sm:$0xf]
    %v114 = vld [vmem:[%s3 + $0x8] sm:$0xf]
    %v115 = vld [vmem:[%s3 + $0xc] sm:$0xf]
    %v116 = vld [vmem:[%s3 + $0x10] sm:$0xf]
    %v117 = vld [vmem:[%s3 + $0x14] sm:$0xf]
    %v118 = vld [vmem:[%s3 + $0x18] sm:$0xf]
    %v119 = vld [vmem:[%s3 + $0x1c] sm:$0xf]
    %v120 = vld [vmem:[%s3 + $0x20] sm:$0xf]
    %v121 = vld [vmem:[%s3 + $0x24] sm:$0xf]
    %v122 = vld [vmem:[%s3 + $0x28] sm:$0xf]
    %v123 = vld [vmem:[%s3 + $0x2c] sm:$0xf]
    %v124 = vld [vmem:[%s3 + $0x30] sm:$0xf]
    %v125 = vld [vmem:[%s3 + $0x34] sm:$0xf]
    %v126 = vld [vmem:[%s3 + $0x38] sm:$0xf]
    %v127 = vld [vmem:[%s3 + $0x3c] sm:$0xf]
    %v128 = vld [vmem:[%s4] sm:$0x1]
    %v130 = vlaneseq
    %v131 = vshrl.u32 %v130, 7
    %v132 = vsub.s32 0, %v131
    %v133 = vrot.slane %v128, %v132
    %v151 = vunpack.c.l.b16 %v112
    %v152 = vunpack.c.l.b16 %v113
    %v153 = vunpack.c.l.b16 %v114
    %v154 = vunpack.c.l.b16 %v115
    %v155 = vunpack.c.l.b16 %v116
    %v156 = vunpack.c.l.b16 %v117
    %v157 = vunpack.c.l.b16 %v118
    %v158 = vunpack.c.l.b16 %v119
    %v159 = vunpack.c.l.b16 %v120
    %v160 = vunpack.c.l.b16 %v121
    %v161 = vunpack.c.l.b16 %v122
    %v162 = vunpack.c.l.b16 %v123
    %v163 = vunpack.c.l.b16 %v124
    %v164 = vunpack.c.l.b16 %v125
    %v165 = vunpack.c.l.b16 %v126
    %v166 = vunpack.c.l.b16 %v127
    %v167 = vpack.c.b16 %v152, %v151
    %v168 = vpack.c.b16 %v154, %v153
    %v169 = vpack.c.b16 %v156, %v155
    %v170 = vpack.c.b16 %v158, %v157
    %v171 = vpack.c.b16 %v160, %v159
    %v172 = vpack.c.b16 %v162, %v161
    %v173 = vpack.c.b16 %v164, %v163
    %v174 = vpack.c.b16 %v166, %v165
    %183 = vmatprep.subr.bf16.mxu0 0
    %184 = vmatpush1.bf16.msra.mxu0 %v167
    %185 = vmatprep.subr.bf16.mxu0 0
    %186 = vmatpush1.bf16.msra.mxu0 %v168
    %187 = vmatprep.subr.bf16.mxu0 0
    %188 = vmatpush1.bf16.msra.mxu0 %v169
    %189 = vmatprep.subr.bf16.mxu0 0
    %190 = vmatpush1.bf16.msra.mxu0 %v170
    %191 = vmatprep.subr.bf16.mxu0 0
    %192 = vmatpush1.bf16.msra.mxu0 %v171
    %193 = vmatprep.subr.bf16.mxu0 0
    %194 = vmatpush1.bf16.msra.mxu0 %v172
    %195 = vmatprep.subr.bf16.mxu0 0
    %196 = vmatpush1.bf16.msra.mxu0 %v173
    %197 = vmatprep.subr.bf16.mxu0 0
    %198 = vmatpush1.bf16.msra.mxu0 %v174
    %199 = vmatprep.subr.bf16.mxu0 0
    %200 = vmatpush1.bf16.msra.mxu0 0
    %201 = vmatprep.subr.bf16.mxu0 0
    %202 = vmatpush1.bf16.msra.mxu0 0
    %203 = vmatprep.subr.bf16.mxu0 0
    %204 = vmatpush1.bf16.msra.mxu0 0
    %205 = vmatprep.subr.bf16.mxu0 0
    %206 = vmatpush1.bf16.msra.mxu0 0
    %207 = vmatprep.subr.bf16.mxu0 0
    %208 = vmatpush1.bf16.msra.mxu0 0
    %209 = vmatprep.subr.bf16.mxu0 0
    %210 = vmatpush1.bf16.msra.mxu0 0
    %211 = vmatprep.subr.bf16.mxu0 0
    %212 = vmatpush1.bf16.msra.mxu0 0
    %213 = vmatprep.subr.bf16.mxu0 0
    %214 = vmatpush1.bf16.msra.mxu0 0
    %215 = vmatprep.mubr.bf16.mxu0 0
    %216 = vmatmul.mubr.bf16.gmra.mrb[0].mxu0 %v111
    %v217 = vpop.f32.mrb[0].mxu0
    %v218 = vadd.f32 %v133, %v217
    %v219 = vpop.f32.mrb[0].mxu0
    %v220 = vpop.f32.mrb[0].mxu0
    %v221 = vpop.f32.mrb[0].mxu0
    %222 = vdwg.mxu0
    %v223 = vmax.f32 %v218, 0.0
    %v224 = vld [vmem:[%s5] sm:$0x1]
    %v226 = vlaneseq
    %v227 = vshrl.u32 %v226, 7
    %v228 = vsub.s32 0, %v227
    %v229 = vrot.slane %v224, %v228
    %v231 = vmul.f32 %v223, %v229
    %vm232 = vcmask 523264
    %v233 = vsel %vm232, %v231, 0.0
    %234 = vadd.xlane.f32.xlu0 %v233
    %v235 = vpop.xlane.xlu0 %234
    %v236 = vld [vmem:[#allocation3] sm:$0x1]
    %v238 = vlaneseq
    %v239 = vshrl.u32 %v238, 7
    %v240 = vsub.s32 0, %v239
    %v241 = vrot.slane %v236, %v240
    %v243 = vadd.f32 %v235, %v241
    %v244 = vmax.f32 %v243, 0.0
    %vm245 = vcmask 7168
    %246 = vst.msk [vmem:[%s7] sm:$0xff] %vm245, %v244
  $region37: #{tpu_custom_call.1} parent=0 // pred_fallthru
    _
  // Predicated region
  $region38: #{tpu_custom_call.1} parent=0 // pred_check
    _
  $region39: #{tpu_custom_call.1} parent=0 // pred_check_branch
    %248 = sbr.rel (0) target = $region41
  $region40: #{tpu_custom_call.1} parent=0 // pred_region
    _
  $region41: #{tpu_custom_call.1} parent=0 // pred_fallthru
    _
  // Predicated region
  $region42: #{tpu_custom_call.1} parent=0 // pred_check
    _
  $region43: #{tpu_custom_call.1} parent=0 // pred_check_branch
    %250 = sbr.rel (0) target = $region45
  $region44: #{tpu_custom_call.1} parent=0 // pred_region
    _
  $region45: #{tpu_custom_call.1} parent=0 // pred_fallthru
    _

</llo_original>
